<compile_context>
chip_gen: v7x
topology: tpu7x:2x2x1
jax: 0.10.0
libtpu: 0.0.40
codegen_flags: <defaults>
</compile_context>

<pallas_src>
import functools

import jax
import jax.numpy as jnp
from jax.experimental import pallas as pl
from jax.experimental.pallas import tpu as pltpu


# ----------------------------------------------------------------------------
# Kernel
# ----------------------------------------------------------------------------
def _uncertainty_kernel(
    x_ref,                       # [TB, D_in]
    w1_ref, b1_ref,              # [D_in, H], [1, H]
    w2_ref, b2_ref,              # [H, H],    [1, H]
    w3p_ref, b3p_ref,            # [H, 128],  [1, 128]   (cols 0..2 valid)
    wr1x_ref,                    # [D_in, H]
    wfuse_ref, bfuse_ref,        # [H, H],    [1, H]     (folded unc->risk path)
    wr2p_ref, br2p_ref,          # [H, 128],  [1, 128]   (col 3 valid)
    out_ref,                     # [TB, 128]  (cols 0..2 = unc, col 3 = risk)
):
    x = x_ref[...]

    # --- uncertainty_estimator trunk: Lin -> ReLU -> Lin -> ReLU ------------
    h1 = jnp.maximum(
        jnp.dot(x, w1_ref[...], preferred_element_type=jnp.float32) + b1_ref[...], 0.0)
    h2 = jnp.maximum(
        jnp.dot(h1, w2_ref[...], preferred_element_type=jnp.float32) + b2_ref[...], 0.0)

    # --- uncertainty head, lane-padded to 128 output columns ----------------
    unc_p = jnp.dot(h2, w3p_ref[...], preferred_element_type=jnp.float32) + b3p_ref[...]

    # --- risk head with the unc->risk path algebraically folded -------------
    # (no [B,3]x[3,H] matmul, no serial dependency on unc_p)
    hr = jnp.maximum(
        jnp.dot(x, wr1x_ref[...], preferred_element_type=jnp.float32)
        + jnp.dot(h2, wfuse_ref[...], preferred_element_type=jnp.float32)
        + bfuse_ref[...],
        0.0)
    logit_p = jnp.dot(hr, wr2p_ref[...], preferred_element_type=jnp.float32) + br2p_ref[...]
    risk_p = jax.nn.sigmoid(logit_p)

    # --- pack into a single lane-dense output (unmasked full-lane store) ----
    lane = jax.lax.broadcasted_iota(jnp.int32, out_ref.shape, 1)
    out_ref[...] = jnp.where(lane == 3, risk_p, unc_p).astype(out_ref.dtype)


# ----------------------------------------------------------------------------
# Wrapper
# ----------------------------------------------------------------------------
def _round_up(n, m):
    return ((n + m - 1) // m) * m


@functools.partial(jax.jit, static_argnames=("tile_b",))
def uncertainty_analysis(x, params, *, tile_b=256):
    """x: [B, D_in] float32.  params: dict of weights (see init_params).

    Returns (uncertainties [B, 3], risk [B, 1]).
    """
    B, d_in = x.shape
    H = params["w1"].shape[1]
    OUT_W = 128  # lane-dense packed output width

    # ---- f32 wrapper-side param prep: fold + lane-dense padding ------------
    w3, b3 = params["w3"], params["b3"]
    wr1u, br1 = params["wr1u"], params["br1"]
    wr2, br2 = params["wr2"], params["br2"]
    hi = jax.lax.Precision.HIGHEST

    w3p = jnp.zeros((H, OUT_W), jnp.float32).at[:, :3].set(w3)
    b3p = jnp.zeros((1, OUT_W), jnp.float32).at[:, :3].set(b3)
    wr2p = jnp.zeros((H, OUT_W), jnp.float32).at[:, 3:4].set(wr2)
    br2p = jnp.zeros((1, OUT_W), jnp.float32).at[:, 3:4].set(br2)
    wfuse = jnp.dot(w3, wr1u, precision=hi)                 # [H, H]
    bfuse = jnp.dot(b3, wr1u, precision=hi) + br1           # [1, H]

    # ---- batch tiling: sublane-aligned rows, zero-pad the ragged tail ------
    tb = min(tile_b, _round_up(B, 8))                       # multiple of 8
    b_pad = pl.cdiv(B, tb) * tb
    if b_pad != B:
        x = jnp.pad(x, ((0, b_pad - B), (0, 0)))
    grid = (b_pad // tb,)
    n_steps = b_pad // tb

    def rows(shape):                  # row-tiled arrays (x / packed output)
        return pl.BlockSpec(shape, lambda i: (i, 0))

    def resident(a):                  # weights: constant index_map -> stay in VMEM
        return pl.BlockSpec(a.shape, lambda i: (0, 0))

    w_args = (
        params["w1"], params["b1"],
        params["w2"], params["b2"],
        w3p, b3p,
        params["wr1x"],
        wfuse, bfuse,
        wr2p, br2p,
    )

    # Advisory cost hint for XLA's scheduler around the custom call.
    flops = 2 * b_pad * (d_in * H + H * H + H * OUT_W + d_in * H + H * H + H * OUT_W)
    bytes_accessed = 4 * (
        b_pad * d_in + b_pad * OUT_W + sum(int(a.size) for a in w_args))
    cost = pl.CostEstimate(flops=flops,
                           transcendentals=b_pad * OUT_W,
                           bytes_accessed=bytes_accessed)

    packed = pl.pallas_call(
        _uncertainty_kernel,
        out_shape=jax.ShapeDtypeStruct((b_pad, OUT_W), jnp.float32),
        grid=grid,
        in_specs=[rows((tb, d_in))] + [resident(a) for a in w_args],
        out_specs=rows((tb, OUT_W)),
        compiler_params=pltpu.CompilerParams(
            dimension_semantics=("parallel",),   # v7x: shard rows across both TCs
        ),
        cost_estimate=cost,
    )(x, *w_args)

    del n_steps
    return packed[:B, :3], packed[:B, 3:4]


# ----------------------------------------------------------------------------
# Params / reference
# ----------------------------------------------------------------------------
def init_params(key, input_dim, hidden_dim):
    """Deterministic synthetic init; weights stored as [in, out]."""
    ks = jax.random.split(key, 10)

    def lin(kw, kb, fan_in, fan_out):
        bound = 1.0 / jnp.sqrt(fan_in)
        w = jax.random.uniform(kw, (fan_in, fan_out), jnp.float32, -bound, bound)
        b = jax.random.uniform(kb, (1, fan_out), jnp.float32, -bound, bound)
        return w, b

    w1, b1 = lin(ks[0], ks[1], input_dim, hidden_dim)
    w2, b2 = lin(ks[2], ks[3], hidden_dim, hidden_dim)
    w3, b3 = lin(ks[4], ks[5], hidden_dim, 3)
    wr1, br1 = lin(ks[6], ks[7], input_dim + 3, hidden_dim)
    wr2, br2 = lin(ks[8], ks[9], hidden_dim, 1)

    return {
        "w1": w1, "b1": b1,
        "w2": w2, "b2": b2,
        "w3": w3, "b3": b3,
        "wr1x": wr1[:input_dim], "wr1u": wr1[input_dim:], "br1": br1,
        "wr2": wr2, "br2": br2,
    }


def _reference(x, p):
    """Pure-JAX reference matching the original PyTorch forward."""
    h = jnp.maximum(x @ p["w1"] + p["b1"], 0.0)
    h = jnp.maximum(h @ p["w2"] + p["b2"], 0.0)
    unc = h @ p["w3"] + p["b3"]
    cat_w = jnp.concatenate([p["wr1x"], p["wr1u"]], axis=0)
    hr = jnp.maximum(jnp.concatenate([x, unc], axis=-1) @ cat_w + p["br1"], 0.0)
    risk = jax.nn.sigmoid(hr @ p["wr2"] + p["br2"])
    return unc, risk


# ----------------------------------------------------------------------------
# Self-test
# ----------------------------------------------------------------------------
if __name__ == "__main__":
    key = jax.random.PRNGKey(0)
    k_x, k_x2, k_p = jax.random.split(key, 3)

    INPUT_DIM, HIDDEN_DIM = 32, 64
    params = init_params(k_p, INPUT_DIM, HIDDEN_DIM)

    # case 1: sublane-aligned batch
    B = 8
    x = jax.random.normal(k_x, (B, INPUT_DIM), jnp.float32)
    unc, risk = uncertainty_analysis(x, params)
    jax.block_until_ready((unc, risk))

    unc_ref, risk_ref = _reference(x, params)
    assert unc.shape == (B, 3) and risk.shape == (B, 1)
    assert jnp.allclose(unc, unc_ref, atol=1e-5, rtol=1e-5)
    # risk path uses the exact algebraic fold (W3 @ Wr1u); allow f32
    # reassociation noise relative to the unfused reference.
    assert jnp.allclose(risk, risk_ref, atol=1e-4, rtol=1e-4)

    # case 2: ragged batch (exercises row padding + output slicing)
    B2 = 13
    x2 = jax.random.normal(k_x2, (B2, INPUT_DIM), jnp.float32)
    unc2, risk2 = uncertainty_analysis(x2, params)
    jax.block_until_ready((unc2, risk2))
    unc2_ref, risk2_ref = _reference(x2, params)
    assert unc2.shape == (B2, 3) and risk2.shape == (B2, 1)
    assert jnp.allclose(unc2, unc2_ref, atol=1e-5, rtol=1e-5)
    assert jnp.allclose(risk2, risk2_ref, atol=1e-4, rtol=1e-4)

    print("KERNEL_OK")
</pallas_src>

<mosaic_0001>
module attributes {stable_mosaic.version = 11 : i64} {
  func.func @_uncertainty_kernel(%arg0: i32, %arg1: memref<8x32xf32, #tpu.memory_space<vmem>>, %arg2: memref<32x64xf32, #tpu.memory_space<vmem>>, %arg3: memref<1x64xf32, #tpu.memory_space<vmem>>, %arg4: memref<64x64xf32, #tpu.memory_space<vmem>>, %arg5: memref<1x64xf32, #tpu.memory_space<vmem>>, %arg6: memref<64x128xf32, #tpu.memory_space<vmem>>, %arg7: memref<1x128xf32, #tpu.memory_space<vmem>>, %arg8: memref<32x64xf32, #tpu.memory_space<vmem>>, %arg9: memref<64x64xf32, #tpu.memory_space<vmem>>, %arg10: memref<1x64xf32, #tpu.memory_space<vmem>>, %arg11: memref<64x128xf32, #tpu.memory_space<vmem>>, %arg12: memref<1x128xf32, #tpu.memory_space<vmem>>, %arg13: memref<8x128xf32, #tpu.memory_space<vmem>>) attributes {dimension_semantics = [#tpu.dimension_semantics<parallel>], iteration_bounds = array<i64: 1>, scalar_prefetch = 0 : i64, scratch_operands = 0 : i64, tpu.core_type = #tpu.core_type<tc>, window_params = [{transform_indices = @transform_0, window_bounds = array<i64: 8, 32>}, {pipeline_mode = #tpu.pipeline_mode<synchronous>, transform_indices = @transform_1, window_bounds = array<i64: 32, 64>}, {pipeline_mode = #tpu.pipeline_mode<synchronous>, transform_indices = @transform_2, window_bounds = array<i64: 1, 64>}, {pipeline_mode = #tpu.pipeline_mode<synchronous>, transform_indices = @transform_3, window_bounds = array<i64: 64, 64>}, {pipeline_mode = #tpu.pipeline_mode<synchronous>, transform_indices = @transform_4, window_bounds = array<i64: 1, 64>}, {pipeline_mode = #tpu.pipeline_mode<synchronous>, transform_indices = @transform_5, window_bounds = array<i64: 64, 128>}, {pipeline_mode = #tpu.pipeline_mode<synchronous>, transform_indices = @transform_6, window_bounds = array<i64: 1, 128>}, {pipeline_mode = #tpu.pipeline_mode<synchronous>, transform_indices = @transform_7, window_bounds = array<i64: 32, 64>}, {pipeline_mode = #tpu.pipeline_mode<synchronous>, transform_indices = @transform_8, window_bounds = array<i64: 64, 64>}, {pipeline_mode = #tpu.pipeline_mode<synchronous>, transform_indices = @transform_9, window_bounds = array<i64: 1, 64>}, {pipeline_mode = #tpu.pipeline_mode<synchronous>, transform_indices = @transform_10, window_bounds = array<i64: 64, 128>}, {pipeline_mode = #tpu.pipeline_mode<synchronous>, transform_indices = @transform_11, window_bounds = array<i64: 1, 128>}, {transform_indices = @transform_12, window_bounds = array<i64: 8, 128>}]} {
    %c0 = arith.constant 0 : index
    %c0_0 = arith.constant 0 : index
    %0 = vector.load %arg1[%c0, %c0_0] : memref<8x32xf32, #tpu.memory_space<vmem>>, vector<8x32xf32>
    %c0_1 = arith.constant 0 : index
    %c0_2 = arith.constant 0 : index
    %1 = vector.load %arg2[%c0_1, %c0_2] : memref<32x64xf32, #tpu.memory_space<vmem>>, vector<32x64xf32>
    %cst = arith.constant dense<0.000000e+00> : vector<8x64xf32>
    %2 = tpu.matmul %0, %1, %cst {dimension_numbers = #tpu.dot_dimension_numbers<[1], [0], [0], [1], [0, 0, 1, 1], [], []>} : vector<8x32xf32>, vector<32x64xf32>, vector<8x64xf32> -> vector<8x64xf32>
    %c0_3 = arith.constant 0 : index
    %c0_4 = arith.constant 0 : index
    %3 = vector.load %arg3[%c0_3, %c0_4] : memref<1x64xf32, #tpu.memory_space<vmem>>, vector<1x64xf32>
    %4 = vector.broadcast %3 : vector<1x64xf32> to vector<8x64xf32>
    %5 = arith.addf %2, %4 : vector<8x64xf32>
    %cst_5 = arith.constant 0.000000e+00 : f32
    %6 = vector.broadcast %cst_5 : f32 to vector<8x64xf32>
    %7 = arith.maximumf %5, %6 : vector<8x64xf32>
    %c0_6 = arith.constant 0 : index
    %c0_7 = arith.constant 0 : index
    %8 = vector.load %arg4[%c0_6, %c0_7] : memref<64x64xf32, #tpu.memory_space<vmem>>, vector<64x64xf32>
    %cst_8 = arith.constant dense<0.000000e+00> : vector<8x64xf32>
    %9 = tpu.matmul %7, %8, %cst_8 {dimension_numbers = #tpu.dot_dimension_numbers<[1], [0], [0], [1], [0, 0, 1, 1], [], []>} : vector<8x64xf32>, vector<64x64xf32>, vector<8x64xf32> -> vector<8x64xf32>
    %c0_9 = arith.constant 0 : index
    %c0_10 = arith.constant 0 : index
    %10 = vector.load %arg5[%c0_9, %c0_10] : memref<1x64xf32, #tpu.memory_space<vmem>>, vector<1x64xf32>
    %11 = vector.broadcast %10 : vector<1x64xf32> to vector<8x64xf32>
    %12 = arith.addf %9, %11 : vector<8x64xf32>
    %cst_11 = arith.constant 0.000000e+00 : f32
    %13 = vector.broadcast %cst_11 : f32 to vector<8x64xf32>
    %14 = arith.maximumf %12, %13 : vector<8x64xf32>
    %c0_12 = arith.constant 0 : index
    %c0_13 = arith.constant 0 : index
    %15 = vector.load %arg6[%c0_12, %c0_13] : memref<64x128xf32, #tpu.memory_space<vmem>>, vector<64x128xf32>
    %cst_14 = arith.constant dense<0.000000e+00> : vector<8x128xf32>
    %16 = tpu.matmul %14, %15, %cst_14 {dimension_numbers = #tpu.dot_dimension_numbers<[1], [0], [0], [1], [0, 0, 1, 1], [], []>} : vector<8x64xf32>, vector<64x128xf32>, vector<8x128xf32> -> vector<8x128xf32>
    %c0_15 = arith.constant 0 : index
    %c0_16 = arith.constant 0 : index
    %17 = vector.load %arg7[%c0_15, %c0_16] : memref<1x128xf32, #tpu.memory_space<vmem>>, vector<1x128xf32>
    %18 = vector.broadcast %17 : vector<1x128xf32> to vector<8x128xf32>
    %19 = arith.addf %16, %18 : vector<8x128xf32>
    %c0_17 = arith.constant 0 : index
    %c0_18 = arith.constant 0 : index
    %20 = vector.load %arg8[%c0_17, %c0_18] : memref<32x64xf32, #tpu.memory_space<vmem>>, vector<32x64xf32>
    %cst_19 = arith.constant dense<0.000000e+00> : vector<8x64xf32>
    %21 = tpu.matmul %0, %20, %cst_19 {dimension_numbers = #tpu.dot_dimension_numbers<[1], [0], [0], [1], [0, 0, 1, 1], [], []>} : vector<8x32xf32>, vector<32x64xf32>, vector<8x64xf32> -> vector<8x64xf32>
    %c0_20 = arith.constant 0 : index
    %c0_21 = arith.constant 0 : index
    %22 = vector.load %arg9[%c0_20, %c0_21] : memref<64x64xf32, #tpu.memory_space<vmem>>, vector<64x64xf32>
    %cst_22 = arith.constant dense<0.000000e+00> : vector<8x64xf32>
    %23 = tpu.matmul %14, %22, %cst_22 {dimension_numbers = #tpu.dot_dimension_numbers<[1], [0], [0], [1], [0, 0, 1, 1], [], []>} : vector<8x64xf32>, vector<64x64xf32>, vector<8x64xf32> -> vector<8x64xf32>
    %24 = arith.addf %21, %23 : vector<8x64xf32>
    %c0_23 = arith.constant 0 : index
    %c0_24 = arith.constant 0 : index
    %25 = vector.load %arg10[%c0_23, %c0_24] : memref<1x64xf32, #tpu.memory_space<vmem>>, vector<1x64xf32>
    %26 = vector.broadcast %25 : vector<1x64xf32> to vector<8x64xf32>
    %27 = arith.addf %24, %26 : vector<8x64xf32>
    %cst_25 = arith.constant 0.000000e+00 : f32
    %28 = vector.broadcast %cst_25 : f32 to vector<8x64xf32>
    %29 = arith.maximumf %27, %28 : vector<8x64xf32>
    %c0_26 = arith.constant 0 : index
    %c0_27 = arith.constant 0 : index
    %30 = vector.load %arg11[%c0_26, %c0_27] : memref<64x128xf32, #tpu.memory_space<vmem>>, vector<64x128xf32>
    %cst_28 = arith.constant dense<0.000000e+00> : vector<8x128xf32>
    %31 = tpu.matmul %29, %30, %cst_28 {dimension_numbers = #tpu.dot_dimension_numbers<[1], [0], [0], [1], [0, 0, 1, 1], [], []>} : vector<8x64xf32>, vector<64x128xf32>, vector<8x128xf32> -> vector<8x128xf32>
    %c0_29 = arith.constant 0 : index
    %c0_30 = arith.constant 0 : index
    %32 = vector.load %arg12[%c0_29, %c0_30] : memref<1x128xf32, #tpu.memory_space<vmem>>, vector<1x128xf32>
    %33 = vector.broadcast %32 : vector<1x128xf32> to vector<8x128xf32>
    %34 = arith.addf %31, %33 : vector<8x128xf32>
    %35 = arith.negf %34 : vector<8x128xf32>
    %36 = math.exp %35 : vector<8x128xf32>
    %cst_31 = arith.constant 1.000000e+00 : f32
    %37 = vector.broadcast %cst_31 : f32 to vector<8x128xf32>
    %38 = arith.addf %37, %36 : vector<8x128xf32>
    %39 = arith.divf %37, %38 : vector<8x128xf32>
    %40 = tpu.iota {dimensions = array<i32: 1>} : vector<8x128xi32>
    %c3_i32 = arith.constant 3 : i32
    %41 = vector.broadcast %c3_i32 : i32 to vector<8x128xi32>
    %42 = arith.cmpi eq, %40, %41 : vector<8x128xi32>
    %43 = arith.select %42, %39, %19 : vector<8x128xi1>, vector<8x128xf32>
    %c0_32 = arith.constant 0 : index
    %c0_33 = arith.constant 0 : index
    %44 = vector.load %arg13[%c0_32, %c0_33] : memref<8x128xf32, #tpu.memory_space<vmem>>, vector<8x128xf32>
    tpu.vector_store %arg13[%c0_32, %c0_33], %43 {strides = array<i32>} : memref<8x128xf32, #tpu.memory_space<vmem>>, vector<8x128xf32>,
    return
  }
  func.func @transform_0(%arg0: i32) -> (i32, i32) {
    %c0_i32 = arith.constant 0 : i32
    %c0_i32_0 = arith.constant 0 : i32
    return %arg0, %c0_i32 : i32, i32
  }
  func.func @transform_1(%arg0: i32) -> (i32, i32) {
    %c0_i32 = arith.constant 0 : i32
    %c0_i32_0 = arith.constant 0 : i32
    %c0_i32_1 = arith.constant 0 : i32
    return %c0_i32, %c0_i32_0 : i32, i32
  }
  func.func @transform_2(%arg0: i32) -> (i32, i32) {
    %c0_i32 = arith.constant 0 : i32
    %c0_i32_0 = arith.constant 0 : i32
    %c0_i32_1 = arith.constant 0 : i32
    return %c0_i32, %c0_i32_0 : i32, i32
  }
  func.func @transform_3(%arg0: i32) -> (i32, i32) {
    %c0_i32 = arith.constant 0 : i32
    %c0_i32_0 = arith.constant 0 : i32
    %c0_i32_1 = arith.constant 0 : i32
    return %c0_i32, %c0_i32_0 : i32, i32
  }
  func.func @transform_4(%arg0: i32) -> (i32, i32) {
    %c0_i32 = arith.constant 0 : i32
    %c0_i32_0 = arith.constant 0 : i32
    %c0_i32_1 = arith.constant 0 : i32
    return %c0_i32, %c0_i32_0 : i32, i32
  }
  func.func @transform_5(%arg0: i32) -> (i32, i32) {
    %c0_i32 = arith.constant 0 : i32
    %c0_i32_0 = arith.constant 0 : i32
    %c0_i32_1 = arith.constant 0 : i32
    return %c0_i32, %c0_i32_0 : i32, i32
  }
  func.func @transform_6(%arg0: i32) -> (i32, i32) {
    %c0_i32 = arith.constant 0 : i32
    %c0_i32_0 = arith.constant 0 : i32
    %c0_i32_1 = arith.constant 0 : i32
    return %c0_i32, %c0_i32_0 : i32, i32
  }
  func.func @transform_7(%arg0: i32) -> (i32, i32) {
    %c0_i32 = arith.constant 0 : i32
    %c0_i32_0 = arith.constant 0 : i32
    %c0_i32_1 = arith.constant 0 : i32
    return %c0_i32, %c0_i32_0 : i32, i32
  }
  func.func @transform_8(%arg0: i32) -> (i32, i32) {
    %c0_i32 = arith.constant 0 : i32
    %c0_i32_0 = arith.constant 0 : i32
    %c0_i32_1 = arith.constant 0 : i32
    return %c0_i32, %c0_i32_0 : i32, i32
  }
  func.func @transform_9(%arg0: i32) -> (i32, i32) {
    %c0_i32 = arith.constant 0 : i32
    %c0_i32_0 = arith.constant 0 : i32
    %c0_i32_1 = arith.constant 0 : i32
    return %c0_i32, %c0_i32_0 : i32, i32
  }
  func.func @transform_10(%arg0: i32) -> (i32, i32) {
    %c0_i32 = arith.constant 0 : i32
    %c0_i32_0 = arith.constant 0 : i32
    %c0_i32_1 = arith.constant 0 : i32
    return %c0_i32, %c0_i32_0 : i32, i32
  }
  func.func @transform_11(%arg0: i32) -> (i32, i32) {
    %c0_i32 = arith.constant 0 : i32
    %c0_i32_0 = arith.constant 0 : i32
    %c0_i32_1 = arith.constant 0 : i32
    return %c0_i32, %c0_i32_0 : i32, i32
  }
  func.func @transform_12(%arg0: i32) -> (i32, i32) {
    %c0_i32 = arith.constant 0 : i32
    %c0_i32_0 = arith.constant 0 : i32
    return %arg0, %c0_i32 : i32, i32
  }
}

</mosaic_0001>

<llo_original>
// kernel: uncertainty_analysis.1
$region0: #{uncertainty_analysis.1}
  #allocation0 [shape = 'u32[]', space=smem, size = 0x4, offset = 0x4, fixed_abs, tag = 'smem constant byte address 0x4 - core index']
  #allocation1 [shape = 'u32[144,128]{1,0:T(1,128)}', space=vmem, size = 0x12000, scoped, tag = 'internal scratch']
  %s0 = inlined_call_operand.vmem [shape: f32[8,32], index: 0, kind: input, shape index: {}]
  %s1 = inlined_call_operand.vmem [shape: f32[32,64], index: 1, kind: input, shape index: {}]
  %s2 = inlined_call_operand.vmem [shape: f32[1,64], index: 2, kind: input, shape index: {}]
  %s3 = inlined_call_operand.vmem [shape: f32[64,64], index: 3, kind: input, shape index: {}]
  %s4 = inlined_call_operand.vmem [shape: f32[1,64], index: 4, kind: input, shape index: {}]
  %s5 = inlined_call_operand.vmem [shape: f32[64,128], index: 5, kind: input, shape index: {}]
  %s6 = inlined_call_operand.vmem [shape: f32[1,128], index: 6, kind: input, shape index: {}]
  %s7 = inlined_call_operand.vmem [shape: f32[32,64], index: 7, kind: input, shape index: {}]
  %s8 = inlined_call_operand.vmem [shape: f32[64,64], index: 8, kind: input, shape index: {}]
  %s9 = inlined_call_operand.vmem [shape: f32[1,64], index: 9, kind: input, shape index: {}]
  %s10 = inlined_call_operand.vmem [shape: f32[64,128], index: 10, kind: input, shape index: {}]
  %s11 = inlined_call_operand.vmem [shape: f32[1,128], index: 11, kind: input, shape index: {}]
  %s12 = inlined_call_operand.vmem [shape: f32[8,128], index: 12, kind: output, shape index: {}]
  %s13 = sld [smem:[#allocation0]]
  $region58: #{uncertainty_analysis.1} parent=0
    _
  %s15 = ssub.s32 1, %s13
  %s16 = scalar_select 0, %s15, %s13
  // Predicated region
  $region2: #{uncertainty_analysis.1} parent=0 // pred_check
    _
  $region3: #{uncertainty_analysis.1} parent=0 // pred_check_branch
    %18 = sbr.rel (0) target = $region5
  $region4: #{uncertainty_analysis.1} parent=0 // pred_region
    _
  $region5: #{uncertainty_analysis.1} parent=0 // pred_fallthru
    _
  // Predicated region
  $region6: #{uncertainty_analysis.1} parent=0 // pred_check
    _
  $region7: #{uncertainty_analysis.1} parent=0 // pred_check_branch
    %20 = sbr.rel (0) target = $region9
  $region8: #{uncertainty_analysis.1} parent=0 // pred_region
    _
  $region9: #{uncertainty_analysis.1} parent=0 // pred_fallthru
    _
  // Predicated region
  $region10: #{uncertainty_analysis.1} parent=0 // pred_check
    _
  $region11: #{uncertainty_analysis.1} parent=0 // pred_check_branch
    %22 = sbr.rel (0) target = $region13
  $region12: #{uncertainty_analysis.1} parent=0 // pred_region
    _
  $region13: #{uncertainty_analysis.1} parent=0 // pred_fallthru
    _
  // Predicated region
  $region14: #{uncertainty_analysis.1} parent=0 // pred_check
    _
  $region15: #{uncertainty_analysis.1} parent=0 // pred_check_branch
    %24 = sbr.rel (0) target = $region17
  $region16: #{uncertainty_analysis.1} parent=0 // pred_region
    _
  $region17: #{uncertainty_analysis.1} parent=0 // pred_fallthru
    _
  // Predicated region
  $region18: #{uncertainty_analysis.1} parent=0 // pred_check
    _
  $region19: #{uncertainty_analysis.1} parent=0 // pred_check_branch
    %26 = sbr.rel (0) target = $region21
  $region20: #{uncertainty_analysis.1} parent=0 // pred_region
    _
  $region21: #{uncertainty_analysis.1} parent=0 // pred_fallthru
    _
  // Predicated region
  $region22: #{uncertainty_analysis.1} parent=0 // pred_check
    _
  $region23: #{uncertainty_analysis.1} parent=0 // pred_check_branch
    %28 = sbr.rel (0) target = $region25
  $region24: #{uncertainty_analysis.1} parent=0 // pred_region
    _
  $region25: #{uncertainty_analysis.1} parent=0 // pred_fallthru
    _
  // Predicated region
  $region26: #{uncertainty_analysis.1} parent=0 // pred_check
    _
  $region27: #{uncertainty_analysis.1} parent=0 // pred_check_branch
    %30 = sbr.rel (0) target = $region29
  $region28: #{uncertainty_analysis.1} parent=0 // pred_region
    _
  $region29: #{uncertainty_analysis.1} parent=0 // pred_fallthru
    _
  // Predicated region
  $region30: #{uncertainty_analysis.1} parent=0 // pred_check
    _
  $region31: #{uncertainty_analysis.1} parent=0 // pred_check_branch
    %32 = sbr.rel (0) target = $region33
  $region32: #{uncertainty_analysis.1} parent=0 // pred_region
    _
  $region33: #{uncertainty_analysis.1} parent=0 // pred_fallthru
    _
  // Predicated region
  $region34: #{uncertainty_analysis.1} parent=0 // pred_check
    _
  $region35: #{uncertainty_analysis.1} parent=0 // pred_check_branch
    %34 = sbr.rel (0) target = $region37
  $region36: #{uncertainty_analysis.1} parent=0 // pred_region
    _
  $region37: #{uncertainty_analysis.1} parent=0 // pred_fallthru
    _
  // Predicated region
  $region38: #{uncertainty_analysis.1} parent=0 // pred_check
    _
  $region39: #{uncertainty_analysis.1} parent=0 // pred_check_branch
    %36 = sbr.rel (0) target = $region41
  $region40: #{uncertainty_analysis.1} parent=0 // pred_region
    _
  $region41: #{uncertainty_analysis.1} parent=0 // pred_fallthru
    _
  // Predicated region
  $region42: #{uncertainty_analysis.1} parent=0 // pred_check
    _
  $region43: #{uncertainty_analysis.1} parent=0 // pred_check_branch
    %38 = sbr.rel (0) target = $region45
  $region44: #{uncertainty_analysis.1} parent=0 // pred_region
    _
  $region45: #{uncertainty_analysis.1} parent=0 // pred_fallthru
    _
  // Predicated region
  $region46: #{uncertainty_analysis.1} parent=0 // pred_check
    _
  $region47: #{uncertainty_analysis.1} parent=0 // pred_check_branch
    %40 = sbr.rel (0) target = $region49
  $region48: #{uncertainty_analysis.1} parent=0 // pred_region
    _
  $region49: #{uncertainty_analysis.1} parent=0 // pred_fallthru
    _
  %v41 = vld [vmem:[%s0] sm:$0xff]
  %v42 = vld [vmem:[%s1] sm:$0xff]
  %v43 = vld [vmem:[%s1 + $0x8] sm:$0xff]
  %v44 = vld [vmem:[%s1 + $0x10] sm:$0xff]
  %v45 = vld [vmem:[%s1 + $0x18] sm:$0xff]
  %v46 = vld [vmem:[%s2] sm:$0x1]
  %v48 = vlaneseq
  %v49 = vshrl.u32 %v48, 7
  %v50 = vsub.s32 0, %v49
  %v51 = vrot.slane %v46, %v50
  %vm53 = vcmask 261120
  %v55 = vsel %vm53, %v41, 0
  %57 = vmatprep.subr.mxu0 0.0
  %58 = vmatpush1.msra.mxu0 %v42
  %59 = vmatprep.subr.mxu0 0.0
  %60 = vmatpush1.msra.mxu0 %v43
  %61 = vmatprep.subr.mxu0 0.0
  %62 = vmatpush1.msra.mxu0 %v44
  %63 = vmatprep.subr.mxu0 0.0
  %64 = vmatpush1.msra.mxu0 %v45
  %65 = vmatprep.subr.mxu0 0.0
  %66 = vmatpush1.msra.mxu0 0.0
  %67 = vmatprep.subr.mxu0 0.0
  %68 = vmatpush1.msra.mxu0 0.0
  %69 = vmatprep.subr.mxu0 0.0
  %70 = vmatpush1.msra.mxu0 0.0
  %71 = vmatprep.subr.mxu0 0.0
  %72 = vmatpush1.msra.mxu0 0.0
  %73 = vmatprep.subr.mxu0 0.0
  %74 = vmatpush1.msra.mxu0 0.0
  %75 = vmatprep.subr.mxu0 0.0
  %76 = vmatpush1.msra.mxu0 0.0
  %77 = vmatprep.subr.mxu0 0.0
  %78 = vmatpush1.msra.mxu0 0.0
  %79 = vmatprep.subr.mxu0 0.0
  %80 = vmatpush1.msra.mxu0 0.0
  %81 = vmatprep.subr.mxu0 0.0
  %82 = vmatpush1.msra.mxu0 0.0
  %83 = vmatprep.subr.mxu0 0.0
  %84 = vmatpush1.msra.mxu0 0.0
  %85 = vmatprep.subr.mxu0 0.0
  %86 = vmatpush1.msra.mxu0 0.0
  %87 = vmatprep.subr.mxu0 0.0
  %88 = vmatpush1.msra.mxu0 0.0
  %89 = vmatprep.subr.mxu0 0.0
  %90 = vmatpush1.msra.mxu0 0.0
  %91 = vmatprep.subr.mxu0 0.0
  %92 = vmatpush1.msra.mxu0 0.0
  %93 = vmatprep.subr.mxu0 0.0
  %94 = vmatpush1.msra.mxu0 0.0
  %95 = vmatprep.subr.mxu0 0.0
  %96 = vmatpush1.msra.mxu0 0.0
  %97 = vmatprep.subr.mxu0 0.0
  %98 = vmatpush1.msra.mxu0 0.0
  %99 = vmatprep.subr.mxu0 0.0
  %100 = vmatpush1.msra.mxu0 0.0
  %101 = vmatprep.subr.mxu0 0.0
  %102 = vmatpush1.msra.mxu0 0.0
  %103 = vmatprep.subr.mxu0 0.0
  %104 = vmatpush1.msra.mxu0 0.0
  %105 = vmatprep.subr.mxu0 0.0
  %106 = vmatpush1.msra.mxu0 0.0
  %107 = vmatprep.subr.mxu0 0.0
  %108 = vmatpush1.msra.mxu0 0.0
  %109 = vmatprep.subr.mxu0 0.0
  %110 = vmatpush1.msra.mxu0 0.0
  %111 = vmatprep.subr.mxu0 0.0
  %112 = vmatpush1.msra.mxu0 0.0
  %113 = vmatprep.subr.mxu0 0.0
  %114 = vmatpush1.msra.mxu0 0.0
  %115 = vmatprep.subr.mxu0 0.0
  %116 = vmatpush1.msra.mxu0 0.0
  %117 = vmatprep.subr.mxu0 0.0
  %118 = vmatpush1.msra.mxu0 0.0
  %119 = vmatprep.subr.mxu0 0.0
  %120 = vmatpush1.msra.mxu0 0.0
  %121 = vmatprep.mubr.f32.mxu0 0.0
  %122 = vmatmul.mubr.f32.gmra.mrb[0].mxu0 %v55
  %v123 = vpop.f32.mrb[0].mxu0
  %v124 = vadd.f32 %v51, %v123
  %v125 = vpop.f32.mrb[0].mxu0
  %126 = vdwg.mxu0
  %v127 = vmax.f32 %v124, 0.0
  %v128 = vld [vmem:[%s3] sm:$0xff]
  %v129 = vld [vmem:[%s3 + $0x8] sm:$0xff]
  %v130 = vld [vmem:[%s3 + $0x10] sm:$0xff]
  %v131 = vld [vmem:[%s3 + $0x18] sm:$0xff]
  %v132 = vld [vmem:[%s3 + $0x20] sm:$0xff]
  %v133 = vld [vmem:[%s3 + $0x28] sm:$0xff]
  %v134 = vld [vmem:[%s3 + $0x30] sm:$0xff]
  %v135 = vld [vmem:[%s3 + $0x38] sm:$0xff]
  %v136 = vld [vmem:[%s4] sm:$0x1]
  %v138 = vlaneseq
  %v139 = vshrl.u32 %v138, 7
  %v140 = vsub.s32 0, %v139
  %v141 = vrot.slane %v136, %v140
  %vm143 = vcmask 523264
  %v145 = vsel %vm143, %v127, 0
  %147 = vmatprep.subr.mxu0 0.0
  %148 = vmatpush1.msra.mxu0 %v128
  %149 = vmatprep.subr.mxu0 0.0
  %150 = vmatpush1.msra.mxu0 %v129
  %151 = vmatprep.subr.mxu0 0.0
  %152 = vmatpush1.msra.mxu0 %v130
  %153 = vmatprep.subr.mxu0 0.0
  %154 = vmatpush1.msra.mxu0 %v131
  %155 = vmatprep.subr.mxu0 0.0
  %156 = vmatpush1.msra.mxu0 %v132
  %157 = vmatprep.subr.mxu0 0.0
  %158 = vmatpush1.msra.mxu0 %v133
  %159 = vmatprep.subr.mxu0 0.0
  %160 = vmatpush1.msra.mxu0 %v134
  %161 = vmatprep.subr.mxu0 0.0
  %162 = vmatpush1.msra.mxu0 %v135
  %163 = vmatprep.subr.mxu0 0.0
  %164 = vmatpush1.msra.mxu0 0.0
  %165 = vmatprep.subr.mxu0 0.0
  %166 = vmatpush1.msra.mxu0 0.0
  %167 = vmatprep.subr.mxu0 0.0
  %168 = vmatpush1.msra.mxu0 0.0
  %169 = vmatprep.subr.mxu0 0.0
  %170 = vmatpush1.msra.mxu0 0.0
  %171 = vmatprep.subr.mxu0 0.0
  %172 = vmatpush1.msra.mxu0 0.0
  %173 = vmatprep.subr.mxu0 0.0
  %174 = vmatpush1.msra.mxu0 0.0
  %175 = vmatprep.subr.mxu0 0.0
  %176 = vmatpush1.msra.mxu0 0.0
  %177 = vmatprep.subr.mxu0 0.0
  %178 = vmatpush1.msra.mxu0 0.0
  %179 = vmatprep.subr.mxu0 0.0
  %180 = vmatpush1.msra.mxu0 0.0
  %181 = vmatprep.subr.mxu0 0.0
  %182 = vmatpush1.msra.mxu0 0.0
  %183 = vmatprep.subr.mxu0 0.0
  %184 = vmatpush1.msra.mxu0 0.0
  %185 = vmatprep.subr.mxu0 0.0
  %186 = vmatpush1.msra.mxu0 0.0
  %187 = vmatprep.subr.mxu0 0.0
  %188 = vmatpush1.msra.mxu0 0.0
  %189 = vmatprep.subr.mxu0 0.0
  %190 = vmatpush1.msra.mxu0 0.0
  %191 = vmatprep.subr.mxu0 0.0
  %192 = vmatpush1.msra.mxu0 0.0
  %193 = vmatprep.subr.mxu0 0.0
  %194 = vmatpush1.msra.mxu0 0.0
  %195 = vmatprep.subr.mxu0 0.0
  %196 = vmatpush1.msra.mxu0 0.0
  %197 = vmatprep.subr.mxu0 0.0
  %198 = vmatpush1.msra.mxu0 0.0
  %199 = vmatprep.subr.mxu0 0.0
  %200 = vmatpush1.msra.mxu0 0.0
  %201 = vmatprep.subr.mxu0 0.0
  %202 = vmatpush1.msra.mxu0 0.0
  %203 = vmatprep.subr.mxu0 0.0
  %204 = vmatpush1.msra.mxu0 0.0
  %205 = vmatprep.subr.mxu0 0.0
  %206 = vmatpush1.msra.mxu0 0.0
  %207 = vmatprep.subr.mxu0 0.0
  %208 = vmatpush1.msra.mxu0 0.0
  %209 = vmatprep.subr.mxu0 0.0
  %210 = vmatpush1.msra.mxu0 0.0
  %211 = vmatprep.mubr.f32.mxu0 0.0
  %212 = vmatmul.mubr.f32.gmra.mrb[0].mxu0 %v145
  %v213 = vpop.f32.mrb[0].mxu0
  %v214 = vadd.f32 %v141, %v213
  %v215 = vpop.f32.mrb[0].mxu0
  %216 = vdwg.mxu0
  %v217 = vmax.f32 %v214, 0.0
  %v218 = vld [vmem:[%s5] sm:$0xff]
  %v219 = vld [vmem:[%s5 + $0x8] sm:$0xff]
  %v220 = vld [vmem:[%s5 + $0x10] sm:$0xff]
  %v221 = vld [vmem:[%s5 + $0x18] sm:$0xff]
  %v222 = vld [vmem:[%s5 + $0x20] sm:$0xff]
  %v223 = vld [vmem:[%s5 + $0x28] sm:$0xff]
  %v224 = vld [vmem:[%s5 + $0x30] sm:$0xff]
  %v225 = vld [vmem:[%s5 + $0x38] sm:$0xff]
  %v226 = vld [vmem:[%s6] sm:$0x1]
  %v228 = vlaneseq
  %v229 = vshrl.u32 %v228, 7
  %v230 = vsub.s32 0, %v229
  %v231 = vrot.slane %v226, %v230
  %v234 = vsel %vm143, %v217, 0
  %236 = vmatprep.subr.mxu0 0.0
  %237 = vmatpush1.msra.mxu0 %v218
  %238 = vmatprep.subr.mxu0 0.0
  %239 = vmatpush1.msra.mxu0 %v219
  %240 = vmatprep.subr.mxu0 0.0
  %241 = vmatpush1.msra.mxu0 %v220
  %242 = vmatprep.subr.mxu0 0.0
  %243 = vmatpush1.msra.mxu0 %v221
  %244 = vmatprep.subr.mxu0 0.0
  %245 = vmatpush1.msra.mxu0 %v222
  %246 = vmatprep.subr.mxu0 0.0
  %247 = vmatpush1.msra.mxu0 %v223
  %248 = vmatprep.subr.mxu0 0.0
  %249 = vmatpush1.msra.mxu0 %v224
  %250 = vmatprep.subr.mxu0 0.0
  %251 = vmatpush1.msra.mxu0 %v225
  %252 = vmatprep.subr.mxu0 0.0
  %253 = vmatpush1.msra.mxu0 0.0
  %254 = vmatprep.subr.mxu0 0.0
  %255 = vmatpush1.msra.mxu0 0.0
  %256 = vmatprep.subr.mxu0 0.0
  %257 = vmatpush1.msra.mxu0 0.0
  %258 = vmatprep.subr.mxu0 0.0
  %259 = vmatpush1.msra.mxu0 0.0
  %260 = vmatprep.subr.mxu0 0.0
  %261 = vmatpush1.msra.mxu0 0.0
  %262 = vmatprep.subr.mxu0 0.0
  %263 = vmatpush1.msra.mxu0 0.0
  %264 = vmatprep.subr.mxu0 0.0
  %265 = vmatpush1.msra.mxu0 0.0
  %266 = vmatprep.subr.mxu0 0.0
  %267 = vmatpush1.msra.mxu0 0.0
  %268 = vmatprep.subr.mxu0 0.0
  %269 = vmatpush1.msra.mxu0 0.0
  %270 = vmatprep.subr.mxu0 0.0
  %271 = vmatpush1.msra.mxu0 0.0
  %272 = vmatprep.subr.mxu0 0.0
  %273 = vmatpush1.msra.mxu0 0.0
  %274 = vmatprep.subr.mxu0 0.0
  %275 = vmatpush1.msra.mxu0 0.0
  %276 = vmatprep.subr.mxu0 0.0
  %277 = vmatpush1.msra.mxu0 0.0
  %278 = vmatprep.subr.mxu0 0.0
  %279 = vmatpush1.msra.mxu0 0.0
  %280 = vmatprep.subr.mxu0 0.0
  %281 = vmatpush1.msra.mxu0 0.0
  %282 = vmatprep.subr.mxu0 0.0
  %283 = vmatpush1.msra.mxu0 0.0
  %284 = vmatprep.subr.mxu0 0.0
  %285 = vmatpush1.msra.mxu0 0.0
  %286 = vmatprep.subr.mxu0 0.0
  %287 = vmatpush1.msra.mxu0 0.0
  %288 = vmatprep.subr.mxu0 0.0
  %289 = vmatpush1.msra.mxu0 0.0
  %290 = vmatprep.subr.mxu0 0.0
  %291 = vmatpush1.msra.mxu0 0.0
  %292 = vmatprep.subr.mxu0 0.0
  %293 = vmatpush1.msra.mxu0 0.0
  %294 = vmatprep.subr.mxu0 0.0
  %295 = vmatpush1.msra.mxu0 0.0
  %296 = vmatprep.subr.mxu0 0.0
  %297 = vmatpush1.msra.mxu0 0.0
  %298 = vmatprep.subr.mxu0 0.0
  %299 = vmatpush1.msra.mxu0 0.0
  %300 = vmatprep.mubr.f32.mxu0 0.0
  %301 = vmatmul.mubr.f32.gmra.mrb[0].mxu0 %v234
  %v302 = vpop.f32.mrb[0].mxu0
  %v303 = vadd.f32 %v231, %v302
  %v304 = vpop.f32.mrb[0].mxu0
  %305 = vdwg.mxu0
  %v306 = vld [vmem:[%s7] sm:$0xff]
  %v307 = vld [vmem:[%s7 + $0x8] sm:$0xff]
  %v308 = vld [vmem:[%s7 + $0x10] sm:$0xff]
  %v309 = vld [vmem:[%s7 + $0x18] sm:$0xff]
  %v310 = vld [vmem:[%s8] sm:$0xff]
  %v311 = vld [vmem:[%s8 + $0x8] sm:$0xff]
  %v312 = vld [vmem:[%s8 + $0x10] sm:$0xff]
  %v313 = vld [vmem:[%s8 + $0x18] sm:$0xff]
  %v314 = vld [vmem:[%s8 + $0x20] sm:$0xff]
  %v315 = vld [vmem:[%s8 + $0x28] sm:$0xff]
  %v316 = vld [vmem:[%s8 + $0x30] sm:$0xff]
  %v317 = vld [vmem:[%s8 + $0x38] sm:$0xff]
  %318 = vmatprep.subr.mxu0 0.0
  %319 = vmatpush1.msra.mxu0 %v310
  %320 = vmatprep.subr.mxu0 0.0
  %321 = vmatpush1.msra.mxu0 %v311
  %322 = vmatprep.subr.mxu0 0.0
  %323 = vmatpush1.msra.mxu0 %v312
  %324 = vmatprep.subr.mxu0 0.0
  %325 = vmatpush1.msra.mxu0 %v313
  %326 = vmatprep.subr.mxu0 0.0
  %327 = vmatpush1.msra.mxu0 %v314
  %328 = vmatprep.subr.mxu0 0.0
  %329 = vmatpush1.msra.mxu0 %v315
  %330 = vmatprep.subr.mxu0 0.0
  %331 = vmatpush1.msra.mxu0 %v316
  %332 = vmatprep.subr.mxu0 0.0
  %333 = vmatpush1.msra.mxu0 %v317
  %334 = vmatprep.subr.mxu0 0.0
  %335 = vmatpush1.msra.mxu0 0.0
  %336 = vmatprep.subr.mxu0 0.0
  %337 = vmatpush1.msra.mxu0 0.0
  %338 = vmatprep.subr.mxu0 0.0
  %339 = vmatpush1.msra.mxu0 0.0
  %340 = vmatprep.subr.mxu0 0.0
  %341 = vmatpush1.msra.mxu0 0.0
  %342 = vmatprep.subr.mxu0 0.0
  %343 = vmatpush1.msra.mxu0 0.0
  %344 = vmatprep.subr.mxu0 0.0
  %345 = vmatpush1.msra.mxu0 0.0
  %346 = vmatprep.subr.mxu0 0.0
  %347 = vmatpush1.msra.mxu0 0.0
  %348 = vmatprep.subr.mxu0 0.0
  %349 = vmatpush1.msra.mxu0 0.0
  %350 = vmatprep.subr.mxu0 0.0
  %351 = vmatpush1.msra.mxu0 0.0
  %352 = vmatprep.subr.mxu0 0.0
  %353 = vmatpush1.msra.mxu0 0.0
  %354 = vmatprep.subr.mxu0 0.0
  %355 = vmatpush1.msra.mxu0 0.0
  %356 = vmatprep.subr.mxu0 0.0
  %357 = vmatpush1.msra.mxu0 0.0
  %358 = vmatprep.subr.mxu0 0.0
  %359 = vmatpush1.msra.mxu0 0.0
  %360 = vmatprep.subr.mxu0 0.0
  %361 = vmatpush1.msra.mxu0 0.0
  %362 = vmatprep.subr.mxu0 0.0
  %363 = vmatpush1.msra.mxu0 0.0
  %364 = vmatprep.subr.mxu0 0.0
  %365 = vmatpush1.msra.mxu0 0.0
  %366 = vmatprep.subr.mxu0 0.0
  %367 = vmatpush1.msra.mxu0 0.0
  %368 = vmatprep.subr.mxu0 0.0
  %369 = vmatpush1.msra.mxu0 0.0
  %370 = vmatprep.subr.mxu0 0.0
  %371 = vmatpush1.msra.mxu0 0.0
  %372 = vmatprep.subr.mxu0 0.0
  %373 = vmatpush1.msra.mxu0 0.0
  %374 = vmatprep.subr.mxu0 0.0
  %375 = vmatpush1.msra.mxu0 0.0
  %376 = vmatprep.subr.mxu0 0.0
  %377 = vmatpush1.msra.mxu0 0.0
  %378 = vmatprep.subr.mxu0 0.0
  %379 = vmatpush1.msra.mxu0 0.0
  %380 = vmatprep.subr.mxu0 0.0
  %381 = vmatpush1.msra.mxu0 0.0
  %382 = vmatprep.mubr.f32.mxu0 0.0
  %383 = vmatmul.mubr.f32.gmra.mrb[0].mxu0 %v234
  %v384 = vpop.f32.mrb[0].mxu0
  %v385 = vadd.f32 0.0, %v384
  %v386 = vpop.f32.mrb[0].mxu0
  %387 = vdwg.mxu0
  %388 = vmatprep.subr.mxu0 0.0
  %389 = vmatpush1.msra.mxu0 %v306
  %390 = vmatprep.subr.mxu0 0.0
  %391 = vmatpush1.msra.mxu0 %v307
  %392 = vmatprep.subr.mxu0 0.0
  %393 = vmatpush1.msra.mxu0 %v308
  %394 = vmatprep.subr.mxu0 0.0
  %395 = vmatpush1.msra.mxu0 %v309
  %396 = vmatprep.subr.mxu0 0.0
  %397 = vmatpush1.msra.mxu0 0.0
  %398 = vmatprep.subr.mxu0 0.0
  %399 = vmatpush1.msra.mxu0 0.0
  %400 = vmatprep.subr.mxu0 0.0
  %401 = vmatpush1.msra.mxu0 0.0
  %402 = vmatprep.subr.mxu0 0.0
  %403 = vmatpush1.msra.mxu0 0.0
  %404 = vmatprep.subr.mxu0 0.0
  %405 = vmatpush1.msra.mxu0 0.0
  %406 = vmatprep.subr.mxu0 0.0
  %407 = vmatpush1.msra.mxu0 0.0
  %408 = vmatprep.subr.mxu0 0.0
  %409 = vmatpush1.msra.mxu0 0.0
  %410 = vmatprep.subr.mxu0 0.0
  %411 = vmatpush1.msra.mxu0 0.0
  %412 = vmatprep.subr.mxu0 0.0
  %413 = vmatpush1.msra.mxu0 0.0
  %414 = vmatprep.subr.mxu0 0.0
  %415 = vmatpush1.msra.mxu0 0.0
  %416 = vmatprep.subr.mxu0 0.0
  %417 = vmatpush1.msra.mxu0 0.0
  %418 = vmatprep.subr.mxu0 0.0
  %419 = vmatpush1.msra.mxu0 0.0
  %420 = vmatprep.subr.mxu0 0.0
  %421 = vmatpush1.msra.mxu0 0.0
  %422 = vmatprep.subr.mxu0 0.0
  %423 = vmatpush1.msra.mxu0 0.0
  %424 = vmatprep.subr.mxu0 0.0
  %425 = vmatpush1.msra.mxu0 0.0
  %426 = vmatprep.subr.mxu0 0.0
  %427 = vmatpush1.msra.mxu0 0.0
  %428 = vmatprep.subr.mxu0 0.0
  %429 = vmatpush1.msra.mxu0 0.0
  %430 = vmatprep.subr.mxu0 0.0
  %431 = vmatpush1.msra.mxu0 0.0
  %432 = vmatprep.subr.mxu0 0.0
  %433 = vmatpush1.msra.mxu0 0.0
  %434 = vmatprep.subr.mxu0 0.0
  %435 = vmatpush1.msra.mxu0 0.0
  %436 = vmatprep.subr.mxu0 0.0
  %437 = vmatpush1.msra.mxu0 0.0
  %438 = vmatprep.subr.mxu0 0.0
  %439 = vmatpush1.msra.mxu0 0.0
  %440 = vmatprep.subr.mxu0 0.0
  %441 = vmatpush1.msra.mxu0 0.0
  %442 = vmatprep.subr.mxu0 0.0
  %443 = vmatpush1.msra.mxu0 0.0
  %444 = vmatprep.subr.mxu0 0.0
  %445 = vmatpush1.msra.mxu0 0.0
  %446 = vmatprep.subr.mxu0 0.0
  %447 = vmatpush1.msra.mxu0 0.0
  %448 = vmatprep.subr.mxu0 0.0
  %449 = vmatpush1.msra.mxu0 0.0
  %450 = vmatprep.subr.mxu0 0.0
  %451 = vmatpush1.msra.mxu0 0.0
  %452 = vmatprep.mubr.f32.mxu0 0.0
  %453 = vmatmul.mubr.f32.gmra.mrb[0].mxu0 %v55
  %v454 = vpop.f32.mrb[0].mxu0
  %v455 = vadd.f32 %v385, %v454
  %v456 = vpop.f32.mrb[0].mxu0
  %457 = vdwg.mxu0
  %v458 = vld [vmem:[%s9] sm:$0x1]
  %v460 = vlaneseq
  %v461 = vshrl.u32 %v460, 7
  %v462 = vsub.s32 0, %v461
  %v463 = vrot.slane %v458, %v462
  %v465 = vadd.f32 %v455, %v463
  %v466 = vmax.f32 %v465, 0.0
  %v467 = vld [vmem:[%s10] sm:$0xff]
  %v468 = vld [vmem:[%s10 + $0x8] sm:$0xff]
  %v469 = vld [vmem:[%s10 + $0x10] sm:$0xff]
  %v470 = vld [vmem:[%s10 + $0x18] sm:$0xff]
  %v471 = vld [vmem:[%s10 + $0x20] sm:$0xff]
  %v472 = vld [vmem:[%s10 + $0x28] sm:$0xff]
  %v473 = vld [vmem:[%s10 + $0x30] sm:$0xff]
  %v474 = vld [vmem:[%s10 + $0x38] sm:$0xff]
  %v475 = vld [vmem:[%s11] sm:$0x1]
  %v477 = vlaneseq
  %v478 = vshrl.u32 %v477, 7
  %v479 = vsub.s32 0, %v478
  %v480 = vrot.slane %v475, %v479
  %v483 = vsel %vm143, %v466, 0
  %485 = vmatprep.subr.mxu0 0.0
  %486 = vmatpush1.msra.mxu0 %v467
  %487 = vmatprep.subr.mxu0 0.0
  %488 = vmatpush1.msra.mxu0 %v468
  %489 = vmatprep.subr.mxu0 0.0
  %490 = vmatpush1.msra.mxu0 %v469
  %491 = vmatprep.subr.mxu0 0.0
  %492 = vmatpush1.msra.mxu0 %v470
  %493 = vmatprep.subr.mxu0 0.0
  %494 = vmatpush1.msra.mxu0 %v471
  %495 = vmatprep.subr.mxu0 0.0
  %496 = vmatpush1.msra.mxu0 %v472
  %497 = vmatprep.subr.mxu0 0.0
  %498 = vmatpush1.msra.mxu0 %v473
  %499 = vmatprep.subr.mxu0 0.0
  %500 = vmatpush1.msra.mxu0 %v474
  %501 = vmatprep.subr.mxu0 0.0
  %502 = vmatpush1.msra.mxu0 0.0
  %503 = vmatprep.subr.mxu0 0.0
  %504 = vmatpush1.msra.mxu0 0.0
  %505 = vmatprep.subr.mxu0 0.0
  %506 = vmatpush1.msra.mxu0 0.0
  %507 = vmatprep.subr.mxu0 0.0
  %508 = vmatpush1.msra.mxu0 0.0
  %509 = vmatprep.subr.mxu0 0.0
  %510 = vmatpush1.msra.mxu0 0.0
  %511 = vmatprep.subr.mxu0 0.0
  %512 = vmatpush1.msra.mxu0 0.0
  %513 = vmatprep.subr.mxu0 0.0
  %514 = vmatpush1.msra.mxu0 0.0
  %515 = vmatprep.subr.mxu0 0.0
  %516 = vmatpush1.msra.mxu0 0.0
  %517 = vmatprep.subr.mxu0 0.0
  %518 = vmatpush1.msra.mxu0 0.0
  %519 = vmatprep.subr.mxu0 0.0
  %520 = vmatpush1.msra.mxu0 0.0
  %521 = vmatprep.subr.mxu0 0.0
  %522 = vmatpush1.msra.mxu0 0.0
  %523 = vmatprep.subr.mxu0 0.0
  %524 = vmatpush1.msra.mxu0 0.0
  %525 = vmatprep.subr.mxu0 0.0
  %526 = vmatpush1.msra.mxu0 0.0
  %527 = vmatprep.subr.mxu0 0.0
  %528 = vmatpush1.msra.mxu0 0.0
  %529 = vmatprep.subr.mxu0 0.0
  %530 = vmatpush1.msra.mxu0 0.0
  %531 = vmatprep.subr.mxu0 0.0
  %532 = vmatpush1.msra.mxu0 0.0
  %533 = vmatprep.subr.mxu0 0.0
  %534 = vmatpush1.msra.mxu0 0.0
  %535 = vmatprep.subr.mxu0 0.0
  %536 = vmatpush1.msra.mxu0 0.0
  %537 = vmatprep.subr.mxu0 0.0
  %538 = vmatpush1.msra.mxu0 0.0
  %539 = vmatprep.subr.mxu0 0.0
  %540 = vmatpush1.msra.mxu0 0.0
  %541 = vmatprep.subr.mxu0 0.0
  %542 = vmatpush1.msra.mxu0 0.0
  %543 = vmatprep.subr.mxu0 0.0
  %544 = vmatpush1.msra.mxu0 0.0
  %545 = vmatprep.subr.mxu0 0.0
  %546 = vmatpush1.msra.mxu0 0.0
  %547 = vmatprep.subr.mxu0 0.0
  %548 = vmatpush1.msra.mxu0 0.0
  %549 = vmatprep.mubr.f32.mxu0 0.0
  %550 = vmatmul.mubr.f32.gmra.mrb[0].mxu0 %v483
  %v551 = vpop.f32.mrb[0].mxu0
  %v552 = vadd.f32 %v480, %v551
  %v553 = vpop.f32.mrb[0].mxu0
  %554 = vdwg.mxu0
  %v555 = vxor.u32 %v552, 2147483648
  %v556 = vmul.f32 %v555, 1.442695
  %v557 = vpow.pop %v556
  %v558 = vadd.f32 %v557, 1.0
  %v559 = vrcp.pop %v558
  %v560 = vmul.f32 1.0, %v559
  %v561 = vlaneseq
  %v562 = vand.u32 %v561, 127
  %vm563 = vcmp.eq.s32.totalorder %v562, 3
  %v564 = vsel %vm563, %v560, %v303
  %565 = vst [vmem:[%s12] sm:$0xff] %v564
  // Predicated region
  $region50: #{uncertainty_analysis.1} parent=0 // pred_check
    _
  $region51: #{uncertainty_analysis.1} parent=0 // pred_check_branch
    %567 = sbr.rel (0) target = $region53
  $region52: #{uncertainty_analysis.1} parent=0 // pred_region
    _
  $region53: #{uncertainty_analysis.1} parent=0 // pred_fallthru
    _
  // Predicated region
  $region54: #{uncertainty_analysis.1} parent=0 // pred_check
    _
  $region55: #{uncertainty_analysis.1} parent=0 // pred_check_branch
    %569 = sbr.rel (0) target = $region57
  $region56: #{uncertainty_analysis.1} parent=0 // pred_region
    _
  $region57: #{uncertainty_analysis.1} parent=0 // pred_fallthru
    _

</llo_original>
